<compile_context>
chip_gen: v6e
topology: v6e:2x2x1
jax: 0.10.0
libtpu: 0.0.40
codegen_flags: <defaults>
</compile_context>

<pallas_src>
import functools

import jax
import jax.numpy as jnp
from jax import lax
from jax.experimental import pallas as pl
from jax.experimental.pallas import tpu as pltpu

MARGIN = 0.5
_PAIRWISE_EPS = 1e-6  # matches torch.nn.functional.pairwise_distance default eps


def _chip_config():
    """Returns (vmem_budget_bytes, vmem_limit_bytes_or_None, tensorcore_split)."""
    kind = ""
    try:
        kind = jax.devices()[0].device_kind.lower()
    except Exception:
        pass
    if "v6" in kind:                                   # v6e: 1 TC, 128 MiB physical VMEM
        budget, limit, split = 26 << 20, 32 << 20, 1
    elif "7x" in kind or "v7" in kind:                 # v7x: 2 TCs, only 64 MiB physical VMEM
        budget, limit, split = 24 << 20, 30 << 20, 2
    elif "v5 lite" in kind or "v5e" in kind or "v5lite" in kind:
        budget, limit, split = 12 << 20, None, 1       # v5e: 16 MiB default scoped VMEM
    else:                                              # unknown chip: stay conservative
        budget, limit, split = 12 << 20, None, 1
    try:  # refine against the real VMEM capacity when the query is available
        cap = pltpu.get_tpu_info().vmem_capacity_bytes
        budget = min(budget, int(cap * 0.4))
        if limit is not None:
            limit = min(limit, int(cap * 0.5))
    except Exception:
        pass
    return budget, limit, split


def _contrastive_loss_kernel(o1_ref, o2_ref, lab_ref, out_ref, *,
                             n_inner, block_rows, batch, margin, need_mask):
    # out_ref is an (8, 128) f32 block resident across the reduction axis (axis 1);
    # every element of the tile holds the same running partial sum.
    @pl.when(pl.program_id(1) == 0)
    def _():
        out_ref[...] = jnp.zeros_like(out_ref)

    o1 = o1_ref[...].astype(jnp.float32)                 # (TB, D) upcast in VMEM, not HBM
    o2 = o2_ref[...].astype(jnp.float32)                 # (TB, D)
    lab = lab_ref[...].astype(jnp.float32)               # (TB, 1)

    diff = o1 - o2 + _PAIRWISE_EPS
    d2 = jnp.sum(diff * diff, axis=-1, keepdims=True)    # (TB, 1) squared distance
    d = jnp.sqrt(d2)                                     # EUP sqrt
    hinge = jnp.maximum(margin - d, 0.0)
    # pos term uses d2 directly (saves a mul/sqrt round-trip; ~1 ulp vs literal torch).
    loss_rows = (1.0 - lab) * d2 + lab * (hinge * hinge)

    if need_mask:
        # Zero rows beyond the true batch (partial last tile / phantom tail block).
        # Masking the final per-row term also neutralises any garbage (inf/nan) read
        # from the out-of-bounds region of a partial block.
        row0 = (pl.program_id(0) * n_inner + pl.program_id(1)) * block_rows
        rows = row0 + lax.broadcasted_iota(jnp.int32, loss_rows.shape, 0)
        loss_rows = jnp.where(rows < batch, loss_rows, 0.0)

    out_ref[...] += jnp.sum(loss_rows)                   # partial SUM; divide once outside


def contrastive_loss(output1, output2, label, *, margin=MARGIN, block_rows=None):
    """output1, output2: (B, D) any float dtype; label: (B,) or (B, 1). Returns f32 loss."""
    B, D = output1.shape
    assert output2.shape == (B, D)

    itemsize = max(jnp.dtype(output1.dtype).itemsize, jnp.dtype(output2.dtype).itemsize)
    row_align = max(8, 32 // itemsize)          # 8 (f32) / 16 (bf16) / 32 (int8/fp8) packing
    lanes = ((D + 127) // 128) * 128            # lane-padded VMEM width of one data tile

    vmem_budget, vmem_limit, n_split = _chip_config()

    # VMEM bytes per tile row: streamed tiles (native dtype, double-buffered),
    # the lane-sparse (TB,1) label buffers, and ~4 f32 (TB, lanes) temporaries.
    bytes_per_row = (2 * 2 * lanes * itemsize) + (2 * 128 * 4) + (4 * lanes * 4)
    rows_budget = max(row_align, (vmem_budget // bytes_per_row) // row_align * row_align)
    tb = rows_budget if block_rows is None else max(
        row_align, (block_rows // row_align) * row_align)
    tb = min(tb, rows_budget, 2048)                                    # keep row math cheap
    tb = min(tb, ((B + row_align - 1) // row_align) * row_align)       # tiny-batch cap

    nb = -(-B // tb)                                    # number of real batch blocks
    p = n_split if (n_split > 1 and nb >= 2) else 1     # 2-way split only on v7x
    n_inner = -(-nb // p)
    need_mask = (p * n_inner * tb) != B

    lab2d = label.astype(jnp.float32).reshape(B, 1)     # tiny; data tiles stream untouched

    def data_idx(pi, ii):
        # Clamp so a phantom tail block (odd #blocks split over 2 cores) re-reads the
        # last real block instead of going out of bounds; its rows are masked to zero.
        return (jnp.minimum(pi * n_inner + ii, nb - 1), 0)

    kernel = functools.partial(
        _contrastive_loss_kernel, n_inner=n_inner, block_rows=tb,
        batch=B, margin=float(margin), need_mask=need_mask)

    cost = pl.CostEstimate(
        flops=B * (4 * D + 8),
        transcendentals=B,                               # one sqrt per row
        bytes_accessed=2 * B * D * itemsize + B * 4 + p * 8 * 128 * 4,
    )

    partials = pl.pallas_call(
        kernel,
        out_shape=jax.ShapeDtypeStruct((p * 8, 128), jnp.float32),
        grid=(p, n_inner),
        in_specs=[
            pl.BlockSpec((tb, D), data_idx),             # full-extent feature dim: no padding
            pl.BlockSpec((tb, D), data_idx),
            pl.BlockSpec((tb, 1), data_idx),
        ],
        out_specs=pl.BlockSpec((8, 128), lambda pi, ii: (pi, 0)),
        compiler_params=pltpu.CompilerParams(
            dimension_semantics=("parallel", "arbitrary"),
            vmem_limit_bytes=vmem_limit),
        cost_estimate=cost,
    )(output1, output2, lab2d)

    return jnp.sum(partials[::8, 0]) / jnp.float32(B)


def _reference_loss(o1, o2, label, margin=MARGIN):
    # Mirrors torch literally: sqrt'd distance, then squared.
    diff = o1.astype(jnp.float32) - o2.astype(jnp.float32) + _PAIRWISE_EPS
    d = jnp.sqrt(jnp.sum(diff * diff, axis=-1))
    lab = label.astype(jnp.float32).reshape(-1)
    return jnp.mean((1.0 - lab) * d ** 2 + lab * jnp.clip(margin - d, 0.0, None) ** 2)


if __name__ == "__main__":
    key = jax.random.PRNGKey(0)
    k1, k2, k3, k4, k5, k6 = jax.random.split(key, 6)

    # Small shape matching the module's forward (pair of embeddings + binary label).
    B, D = 8, 32
    output1 = jax.random.normal(k1, (B, D), dtype=jnp.float32)
    output2 = jax.random.normal(k2, (B, D), dtype=jnp.float32)
    label = jax.random.bernoulli(k3, 0.5, (B,)).astype(jnp.float32)

    loss = jax.block_until_ready(contrastive_loss(output1, output2, label))
    ref = jax.block_until_ready(_reference_loss(output1, output2, label))
    assert jnp.allclose(loss, ref, rtol=1e-5, atol=1e-6), (loss, ref)

    # Second check: exercises batch tiling, the partial-tile mask, a feature dim that is
    # not a multiple of 128, bf16 streaming (in-kernel upcast) and the 2-core split on v7x.
    B2, D2 = 300, 200
    o1b = jax.random.normal(k4, (B2, D2), dtype=jnp.float32).astype(jnp.bfloat16)
    o2b = jax.random.normal(k5, (B2, D2), dtype=jnp.float32).astype(jnp.bfloat16)
    labb = jax.random.bernoulli(k6, 0.5, (B2,)).astype(jnp.float32)

    loss2 = jax.block_until_ready(contrastive_loss(o1b, o2b, labb, block_rows=64))
    ref2 = jax.block_until_ready(_reference_loss(o1b, o2b, labb))
    assert jnp.allclose(loss2, ref2, rtol=1e-4, atol=1e-5), (loss2, ref2)

    print("KERNEL_OK")
</pallas_src>

<mosaic_0001>
module attributes {stable_mosaic.version = 11 : i64} {
  func.func @_contrastive_loss_kernel(%arg0: i32, %arg1: i32, %arg2: memref<8x32xf32, #tpu.memory_space<vmem>>, %arg3: memref<8x32xf32, #tpu.memory_space<vmem>>, %arg4: memref<8x1xf32, #tpu.memory_space<vmem>>, %arg5: memref<8x128xf32, #tpu.memory_space<vmem>>) attributes {dimension_semantics = [#tpu.dimension_semantics<parallel>, #tpu.dimension_semantics<arbitrary>], iteration_bounds = array<i64: 1, 1>, scalar_prefetch = 0 : i64, scratch_operands = 0 : i64, tpu.core_type = #tpu.core_type<tc>, window_params = [{transform_indices = @transform_0, window_bounds = array<i64: 8, 32>}, {transform_indices = @transform_1, window_bounds = array<i64: 8, 32>}, {transform_indices = @transform_2, window_bounds = array<i64: 8, 1>}, {transform_indices = @transform_3, window_bounds = array<i64: 8, 128>}]} {
    %c0_i32 = arith.constant 0 : i32
    %0 = arith.cmpi eq, %arg1, %c0_i32 : i32
    %1 = arith.extui %0 : i1 to i32
    %c0_i32_0 = arith.constant 0 : i32
    %2 = arith.cmpi ne, %1, %c0_i32_0 : i32
    scf.if %2 {
      %cst_15 = arith.constant 0.000000e+00 : f32
      %31 = vector.broadcast %cst_15 : f32 to vector<8x128xf32>
      %c0_16 = arith.constant 0 : index
      %c0_17 = arith.constant 0 : index
      %32 = vector.load %arg5[%c0_16, %c0_17] : memref<8x128xf32, #tpu.memory_space<vmem>>, vector<8x128xf32>
      tpu.vector_store %arg5[%c0_16, %c0_17], %31 {strides = array<i32>} : memref<8x128xf32, #tpu.memory_space<vmem>>, vector<8x128xf32>,
    } else {
    }
    %c0 = arith.constant 0 : index
    %c0_1 = arith.constant 0 : index
    %3 = vector.load %arg2[%c0, %c0_1] : memref<8x32xf32, #tpu.memory_space<vmem>>, vector<8x32xf32>
    %c0_2 = arith.constant 0 : index
    %c0_3 = arith.constant 0 : index
    %4 = vector.load %arg3[%c0_2, %c0_3] : memref<8x32xf32, #tpu.memory_space<vmem>>, vector<8x32xf32>
    %c0_4 = arith.constant 0 : index
    %c0_5 = arith.constant 0 : index
    %5 = vector.load %arg4[%c0_4, %c0_5] : memref<8x1xf32, #tpu.memory_space<vmem>>, vector<8x1xf32>
    %6 = arith.subf %3, %4 : vector<8x32xf32>
    %cst = arith.constant 9.99999997E-7 : f32
    %7 = vector.broadcast %cst : f32 to vector<8x32xf32>
    %8 = arith.addf %6, %7 : vector<8x32xf32>
    %9 = arith.mulf %8, %8 : vector<8x32xf32>
    %cst_6 = arith.constant dense<0.000000e+00> : vector<8xf32>
    %10 = vector.multi_reduction <add>, %9, %cst_6 [1] : vector<8x32xf32> to vector<8xf32>
    %11 = vector.shape_cast %10 : vector<8xf32> to vector<8x1xf32>
    %12 = math.sqrt %11 : vector<8x1xf32>
    %cst_7 = arith.constant 5.000000e-01 : f32
    %13 = vector.broadcast %cst_7 : f32 to vector<8x1xf32>
    %14 = arith.subf %13, %12 : vector<8x1xf32>
    %cst_8 = arith.constant 0.000000e+00 : f32
    %15 = vector.broadcast %cst_8 : f32 to vector<8x1xf32>
    %16 = arith.maximumf %14, %15 : vector<8x1xf32>
    %cst_9 = arith.constant 1.000000e+00 : f32
    %17 = vector.broadcast %cst_9 : f32 to vector<8x1xf32>
    %18 = arith.subf %17, %5 : vector<8x1xf32>
    %19 = arith.mulf %18, %11 : vector<8x1xf32>
    %20 = arith.mulf %16, %16 : vector<8x1xf32>
    %21 = arith.mulf %5, %20 : vector<8x1xf32>
    %22 = arith.addf %19, %21 : vector<8x1xf32>
    %c0_10 = arith.constant 0 : index
    %c0_11 = arith.constant 0 : index
    %23 = vector.load %arg5[%c0_10, %c0_11] : memref<8x128xf32, #tpu.memory_space<vmem>>, vector<8x128xf32>
    %24 = vector.shape_cast %22 : vector<8x1xf32> to vector<1x8x1xf32>
    %cst_12 = arith.constant dense<0.000000e+00> : vector<1xf32>
    %25 = vector.multi_reduction <add>, %24, %cst_12 [1, 2] : vector<1x8x1xf32> to vector<1xf32>
    %26 = vector.shape_cast %25 : vector<1xf32> to vector<1x1x1xf32>
    %27 = vector.extract %26[0, 0, 0] : f32 from vector<1x1x1xf32>
    %28 = vector.broadcast %27 : f32 to vector<8x128xf32>
    %29 = arith.addf %23, %28 : vector<8x128xf32>
    %c0_13 = arith.constant 0 : index
    %c0_14 = arith.constant 0 : index
    %30 = vector.load %arg5[%c0_13, %c0_14] : memref<8x128xf32, #tpu.memory_space<vmem>>, vector<8x128xf32>
    tpu.vector_store %arg5[%c0_13, %c0_14], %29 {strides = array<i32>} : memref<8x128xf32, #tpu.memory_space<vmem>>, vector<8x128xf32>,
    return
  }
  func.func @transform_0(%arg0: i32, %arg1: i32) -> (i32, i32) {
    %c1_i32 = arith.constant 1 : i32
    %0 = arith.muli %arg0, %c1_i32 : i32
    %1 = arith.addi %0, %arg1 : i32
    %c0_i32 = arith.constant 0 : i32
    %2 = arith.minsi %1, %c0_i32 : i32
    %c0_i32_0 = arith.constant 0 : i32
    %c0_i32_1 = arith.constant 0 : i32
    return %2, %c0_i32_0 : i32, i32
  }
  func.func @transform_1(%arg0: i32, %arg1: i32) -> (i32, i32) {
    %c1_i32 = arith.constant 1 : i32
    %0 = arith.muli %arg0, %c1_i32 : i32
    %1 = arith.addi %0, %arg1 : i32
    %c0_i32 = arith.constant 0 : i32
    %2 = arith.minsi %1, %c0_i32 : i32
    %c0_i32_0 = arith.constant 0 : i32
    %c0_i32_1 = arith.constant 0 : i32
    return %2, %c0_i32_0 : i32, i32
  }
  func.func @transform_2(%arg0: i32, %arg1: i32) -> (i32, i32) {
    %c1_i32 = arith.constant 1 : i32
    %0 = arith.muli %arg0, %c1_i32 : i32
    %1 = arith.addi %0, %arg1 : i32
    %c0_i32 = arith.constant 0 : i32
    %2 = arith.minsi %1, %c0_i32 : i32
    %c0_i32_0 = arith.constant 0 : i32
    %c0_i32_1 = arith.constant 0 : i32
    return %2, %c0_i32_0 : i32, i32
  }
  func.func @transform_3(%arg0: i32, %arg1: i32) -> (i32, i32) {
    %c0_i32 = arith.constant 0 : i32
    %c0_i32_0 = arith.constant 0 : i32
    return %arg0, %c0_i32 : i32, i32
  }
}

</mosaic_0001>

<llo_original>
// kernel: tpu_custom_call.1
$region0: #{tpu_custom_call.1}
  #allocation0 [shape = 'u32[]', space=smem, size = 0x4, offset = 0x4, fixed_abs, tag = 'smem constant byte address 0x4 - core index']
  #allocation1 [shape = 'u32[144,128]{1,0:T(1,128)}', space=vmem, size = 0x12000, scoped, tag = 'internal scratch']
  %s0 = inlined_call_operand.vmem [shape: f32[8,32], index: 0, kind: input, shape index: {}]
  %s1 = inlined_call_operand.hbm [shape: f32[8,32], index: 1, kind: input, shape index: {}]
  %s2 = inlined_call_operand.vmem [shape: f32[8,1], index: 2, kind: input, shape index: {}]
  %s3 = inlined_call_operand.hbm [shape: f32[8,128], index: 3, kind: output, shape index: {}]
  %s4 = sld [smem:[#allocation0]]
  $region30: #{tpu_custom_call.1} parent=0
    _
  %s6 = ssub.s32 1, %s4
  %s7 = scalar_select 0, %s6, %s4
  $region1: #{tpu_custom_call.1} parent=0
    #allocation2 [shape = 'u8[4096]{0}', space=vmem, size = 0x1000, scoped, tag = 'input window, operand 1, single buffered']
    #allocation3 [shape = 's32[1]{0}', space=sflag, size = 0x4, scoped, tag = 'scoped memory for tpu_custom_call.1']
    #allocation4 [shape = 's32[1]{0}', space=sflag, size = 0x4, scoped, tag = 'scoped memory for tpu_custom_call.1']
    #allocation5 [shape = 'u8[4096]{0}', space=vmem, size = 0x1000, scoped, tag = 'output window, operand 0, single buffered']
    %8 = vsyncpa [#allocation3], 0
    %9 = vsyncpa [#allocation4], 0
    // Predicated region
    $region2: #{tpu_custom_call.1} parent=1 // pred_check
      _
    $region3: #{tpu_custom_call.1} parent=1 // pred_check_branch
      %11 = sbr.rel (0) target = $region5
    $region4: #{tpu_custom_call.1} parent=1 // pred_region
      %s12 = sadd.s32 0, 0
      %p13 = scmp.lt.s32.totalorder %s12, 0
      %s14 = scalar_select %p13, %s12, 0
      %p15 = scmp.lt.s32.totalorder %s14, 0
      %s16 = scalar_select %p15, %s14, 0
      %s17 = smul.addr %s16, 8
      %s18 = scalar_lea.vmem %s0, %s17
      %s19 = sadd.s32 0, 0
      %p20 = scmp.lt.s32.totalorder %s19, 0
      %s21 = scalar_select %p20, %s19, 0
    $region5: #{tpu_custom_call.1} parent=1 // pred_fallthru
      _
    // Predicated region
    $region6: #{tpu_custom_call.1} parent=1 // pred_check
      _
    $region7: #{tpu_custom_call.1} parent=1 // pred_check_branch
      %23 = sbr.rel (0) target = $region9
    $region8: #{tpu_custom_call.1} parent=1 // pred_region
      %s24 = sadd.s32 0, 0
      %p25 = scmp.lt.s32.totalorder %s24, 0
      %s26 = scalar_select %p25, %s24, 0
      %s28 = ssub.s32 128, 128
      %29 = vsyncadd [#allocation3], %s28
      %s30 = smul.addr %s26, 128
      %s31 = scalar_lea.hbm %s1, %s30
      %s33 = sshll.u32 [#allocation2], 4
      %s34 = int_to_ptr.vmem [resolvable:$true] %s33
      %36 = dma.hbm_to_vmem [thread:$0]  %s31, 128, %s34, [#allocation3]
    $region9: #{tpu_custom_call.1} parent=1 // pred_fallthru
      _
    // Predicated region
    $region10: #{tpu_custom_call.1} parent=1 // pred_check
      _
    $region11: #{tpu_custom_call.1} parent=1 // pred_check_branch
      %38 = sbr.rel (0) target = $region13
    $region12: #{tpu_custom_call.1} parent=1 // pred_region
      %s39 = sadd.s32 0, 0
      %p40 = scmp.lt.s32.totalorder %s39, 0
      %s41 = scalar_select %p40, %s39, 0
      %p42 = scmp.lt.s32.totalorder %s41, 0
      %s43 = scalar_select %p42, %s41, 0
      %s44 = smul.addr %s43, 8
      %s45 = scalar_lea.vmem %s2, %s44
      %s46 = sadd.s32 0, 0
      %p47 = scmp.lt.s32.totalorder %s46, 0
      %s48 = scalar_select %p47, %s46, 0
    $region13: #{tpu_custom_call.1} parent=1 // pred_fallthru
      _
    // Predicated region
    $region14: #{tpu_custom_call.1} parent=1 // pred_check
      _
    $region15: #{tpu_custom_call.1} parent=1 // pred_check_branch
      %50 = sbr.rel (0) target = $region17
    $region16: #{tpu_custom_call.1} parent=1 // pred_region
      %51 = dma.done [#allocation3], 128
    $region17: #{tpu_custom_call.1} parent=1 // pred_fallthru
      _
    %s52 = sadd.s32 0, 0
    %p53 = scmp.lt.s32.totalorder %s52, 0
    %s54 = scalar_select %p53, %s52, 0
    %p55 = scmp.lt.s32.totalorder %s54, 0
    %s56 = scalar_select %p55, %s54, 0
    %s57 = smul.addr %s56, 8
    %s58 = scalar_lea.vmem %s0, %s57
    %s59 = sadd.s32 0, 0
    %p60 = scmp.lt.s32.totalorder %s59, 0
    %s61 = scalar_select %p60, %s59, 0
    %p62 = scmp.lt.s32.totalorder %s61, 0
    %s63 = scalar_select %p62, %s61, 0
    %s64 = smul.addr %s63, 8
    %s65 = scalar_lea.vmem %s2, %s64
    %s66 = sadd.s32 0, 0
    %p67 = scmp.lt.s32.totalorder %s66, 0
    %s68 = scalar_select %p67, %s66, 0
    %p69 = scmp.lt.s32.totalorder %s68, 0
    %s70 = scalar_select %p69, %s68, 0
    %s71 = smul.addr %s70, 8
    %s72 = scalar_lea.vmem %s0, %s71
    %s73 = sadd.s32 0, 0
    %p74 = scmp.lt.s32.totalorder %s73, 0
    %s75 = scalar_select %p74, %s73, 0
    %s76 = sadd.s32 0, 0
    %p77 = scmp.lt.s32.totalorder %s76, 0
    %s78 = scalar_select %p77, %s76, 0
    %s79 = sadd.s32 0, 0
    %p80 = scmp.lt.s32.totalorder %s79, 0
    %s81 = scalar_select %p80, %s79, 0
    %p82 = scmp.lt.s32.totalorder %s81, 0
    %s83 = scalar_select %p82, %s81, 0
    %s84 = smul.addr %s83, 8
    %s85 = scalar_lea.vmem %s2, %s84
    %s86 = sadd.s32 0, 0
    %p87 = scmp.lt.s32.totalorder %s86, 0
    %s88 = scalar_select %p87, %s86, 0
    %p89 = scmp.eq.s32.totalorder 0, 0
    // Predicated region
    $region18: #{tpu_custom_call.1} parent=1 // pred_check
      %p90 = pneg %p89
    $region19: #{tpu_custom_call.1} parent=1 // pred_check_branch
      %92 = sbr.rel (%p90) target = $region21
    $region20: #{tpu_custom_call.1} parent=1 // pred_region
      %93 = vst [vmem:[#allocation5] sm:$0xff] 0.0
    $region21: #{tpu_custom_call.1} parent=1 // pred_fallthru
      _
    %v94 = vld [vmem:[%s72] sm:$0xff]
    %v95 = vld [vmem:[#allocation2] sm:$0xff]
    %v96 = vld [vmem:[%s85] sm:$0xff]
    %v97 = vsub.f32 %v94, %v95
    %v98 = vadd.f32 %v97, 1e-06
    %v99 = vmul.f32 %v98, %v98
    %vm100 = vcmask 261120
    %v101 = vsel %vm100, %v99, 0.0
    %102 = vadd.xlane.f32.xlu0 %v101
    %v103 = vpop.xlane.xlu0 %102
    %v104 = vrsqrt.pop %v103
    %v105 = vmul.f32 %v103, %v104
    %vm106 = vcmp.eq.f32.partialorder %v103, inf
    %v107 = vsel %vm106, %v103, %v105
    %vm108 = vcmp.eq.f32.partialorder %v103, 0.0
    %v109 = vand.u32 %v103, 2147483648
    %v110 = vsel %vm108, %v109, %v107
    %v111 = vsub.f32 0.5, %v110
    %v112 = vmax.f32 %v111, 0.0
    %v113 = vsub.f32 1.0, %v96
    %v114 = vmul.f32 %v113, %v103
    %v115 = vmul.f32 %v112, %v112
    %v116 = vmul.f32 %v96, %v115
    %v117 = vadd.f32 %v114, %v116
    %v118 = vld [vmem:[#allocation5] sm:$0xff]
    %vm119 = vcmask 7168
    %v120 = vsel %vm119, %v117, 0.0
    %121 = vadd.xlane.f32.xlu0 %v120
    %v122 = vpop.xlane.xlu0 %121
    %v123 = vrot.slane %v122, 4
    %v124 = vadd.f32 %v122, %v123
    %v125 = vrot.slane %v124, 2
    %v126 = vadd.f32 %v124, %v125
    %v127 = vrot.slane %v126, 1
    %v128 = vadd.f32 %v126, %v127
    %s129 = vtos %v128
    %v130 = vstv %s129
    %v131 = vadd.f32 %v118, %v130
    %132 = vst [vmem:[#allocation5] sm:$0xff] %v131
    // Predicated region
    $region22: #{tpu_custom_call.1} parent=1 // pred_check
      _
    $region23: #{tpu_custom_call.1} parent=1 // pred_check_branch
      %134 = sbr.rel (0) target = $region25
    $region24: #{tpu_custom_call.1} parent=1 // pred_region
      %s136 = ssub.s32 128, 128
      %137 = vsyncadd [#allocation4], %s136
      %s139 = sshll.u32 [#allocation5], 4
      %s140 = int_to_ptr.vmem [resolvable:$true] %s139
      %142 = dma.vmem_to_hbm [thread:$0]  %s140, 128, %s3, [#allocation4]
    $region25: #{tpu_custom_call.1} parent=1 // pred_fallthru
      _
    // Predicated region
    $region26: #{tpu_custom_call.1} parent=1 // pred_check
      _
    $region27: #{tpu_custom_call.1} parent=1 // pred_check_branch
      %144 = sbr.rel (0) target = $region29
    $region28: #{tpu_custom_call.1} parent=1 // pred_region
      %145 = dma.done [#allocation4], 128
    $region29: #{tpu_custom_call.1} parent=1 // pred_fallthru
      _
    %146 = vsyncpa [#allocation3], 1
    %147 = vsyncpa [#allocation4], 1

</llo_original>
